<compile_context>
chip_gen: v7x
topology: tpu7x:2x2x1
jax: 0.10.0
libtpu: 0.0.40
codegen_flags: <defaults>
</compile_context>

<pallas_src>
import functools

import jax
import jax.numpy as jnp
from jax import lax
from jax.experimental import pallas as pl
from jax.experimental.pallas import tpu as pltpu

LANES = 128
SUBLANES = 8
# 4096x128 f32 block = 2 MiB/input; x2 inputs x2 pipeline buffers = 8 MiB,
# within the default scoped-VMEM budget on v5e (16 MiB) and v6e/v7x (32 MiB).
MAX_TILE_ROWS = 4096


def _round_up(x, m):
    return ((x + m - 1) // m) * m


def _msle_kernel(p_ref, t_ref, out_ref, *, tile_rows, tiles_per_core,
                 num_tiles, rows, cores):
    """Accumulates sum((log1p(p) - log1p(t))**2) over this core's row tiles
    into a resident, vreg-shaped (8, 128) f32 block.  The cheap final
    cross-lane reduce + divide happens in the wrapper."""
    c = pl.program_id(0)          # core-parallel axis
    i = pl.program_id(1)          # reduction axis over this core's row tiles
    g = c * tiles_per_core + i    # unclamped global row-tile index

    # zero this core's resident accumulator block on its first reduction step
    @pl.when(i == 0)
    def _():
        out_ref[...] = jnp.zeros_like(out_ref)

    def accumulate(masked):
        p = p_ref[...].astype(jnp.float32)
        t = t_ref[...].astype(jnp.float32)
        d = jnp.log1p(p) - jnp.log1p(t)
        d2 = d * d
        if masked:
            # Ragged last tile: rows past the true extent hold garbage from the
            # partial edge-block DMA.  Use a *select* (never a multiply!) so
            # NaN/Inf from log1p of garbage cannot leak into the sum.
            valid = rows - (num_tiles - 1) * tile_rows            # static
            row_id = lax.broadcasted_iota(jnp.int32, (tile_rows, LANES), 0)
            d2 = jnp.where(row_id < valid, d2, 0.0)
        # Fold groups of 8 sublanes into the (8, 128) partial sum: pure VPU
        # adds, no cross-lane (XLU) work inside the hot loop.
        out_ref[0] += d2.reshape(tile_rows // SUBLANES, SUBLANES, LANES).sum(axis=0)

    ragged = (rows % tile_rows) != 0                  # static: partial last tile
    overhang = cores * tiles_per_core > num_tiles     # static: odd split -> skip step

    if not ragged and not overhang:
        # fast path: every tile is full and every grid step is real work
        accumulate(masked=False)
    elif ragged:
        @pl.when(g < num_tiles - 1)
        def _():
            accumulate(masked=False)          # unmasked on all non-final tiles

        @pl.when(g == num_tiles - 1)
        def _():
            accumulate(masked=True)           # mask only the one ragged tile
        # overhang steps (g >= num_tiles) fall through both branches -> skipped
    else:
        @pl.when(g < num_tiles)
        def _():
            accumulate(masked=False)          # skip the clamped overhang step


def msle_loss(predictions, targets):
    """mean((log(p + 1) - log(t + 1))**2), matching the PyTorch MSLELoss."""
    assert predictions.shape == targets.shape
    n = predictions.size
    assert n > 0

    # Flatten row-major: a pure metadata reshape -- no HBM copy, no jnp.pad.
    p_flat = predictions.reshape(-1)
    t_flat = targets.reshape(-1)

    # The kernel consumes the lane-aligned prefix (a free (rows, 128) reshape
    # whenever n % 128 == 0, the overwhelmingly common case).  A < 128-element
    # remainder, if any, is folded in with a tiny wrapper-side reduction.
    main = (n // LANES) * LANES
    total = jnp.zeros((), jnp.float32)

    if main > 0:
        rows = main // LANES
        if main == n:
            p2d = p_flat.reshape(rows, LANES)        # free bitcast, zero copies
            t2d = t_flat.reshape(rows, LANES)
        else:
            p2d = p_flat[:main].reshape(rows, LANES)
            t2d = t_flat[:main].reshape(rows, LANES)

        # Row tile: as large as comfortably fits double-buffered VMEM, always a
        # multiple of 8 (a block may overhang the array; the kernel masks it).
        tile_rows = min(MAX_TILE_ROWS, _round_up(rows, SUBLANES))
        num_tiles = pl.cdiv(rows, tile_rows)

        # Split row tiles across two TensorCores whenever there are >= 2 tiles
        # (no even-divisibility gate: the odd overhang step is clamped in the
        # index_map and skipped in-kernel).  On 1-TC chips the size-2 axis is a
        # cheap serial loop.
        # TODO(synk): switch the leading axis to pltpu.CORE_PARALLEL once the
        # per-chip TensorCore count can be queried reliably.
        cores = 2 if num_tiles >= 2 else 1
        tiles_per_core = pl.cdiv(num_tiles, cores)

        def in_index(c, i):
            # clamp so the (skipped) overhang step never indexes out of bounds
            return (jnp.minimum(c * tiles_per_core + i, num_tiles - 1), 0)

        kernel = functools.partial(
            _msle_kernel, tile_rows=tile_rows, tiles_per_core=tiles_per_core,
            num_tiles=num_tiles, rows=rows, cores=cores)

        itemsize = jnp.dtype(predictions.dtype).itemsize
        cost = pl.CostEstimate(
            flops=5 * main,                    # 2 adds, 1 sub, 1 mul, 1 accumulate
            transcendentals=2 * main,          # two log1p per element
            bytes_accessed=2 * main * itemsize + cores * SUBLANES * LANES * 4,
        )

        partials = pl.pallas_call(
            kernel,
            out_shape=jax.ShapeDtypeStruct((cores, SUBLANES, LANES), jnp.float32),
            grid_spec=pltpu.PrefetchScalarGridSpec(
                num_scalar_prefetch=0,
                grid=(cores, tiles_per_core),
                in_specs=[
                    pl.BlockSpec((tile_rows, LANES), in_index),
                    pl.BlockSpec((tile_rows, LANES), in_index),
                ],
                out_specs=pl.BlockSpec((1, SUBLANES, LANES), lambda c, i: (c, 0, 0)),
            ),
            compiler_params=pltpu.CompilerParams(
                dimension_semantics=("parallel", "arbitrary"),
            ),
            cost_estimate=cost,
        )(p2d, t2d)

        total = total + jnp.sum(partials)

    if main < n:
        # < 128 leftover elements: negligible work, reduce outside the kernel
        pt = p_flat[main:].astype(jnp.float32)
        tt = t_flat[main:].astype(jnp.float32)
        dt = jnp.log1p(pt) - jnp.log1p(tt)
        total = total + jnp.sum(dt * dt)

    return (total / jnp.float32(n)).astype(jnp.float32)


if __name__ == "__main__":
    key = jax.random.PRNGKey(0)
    kp, kt = jax.random.split(key)

    def ref_loss(p, t):
        return jnp.mean((jnp.log(p + 1.0) - jnp.log(t + 1.0)) ** 2)

    # 1) small shape consistent with the module spec (aligned, single tile)
    shape = (2, 4, 16, 16)
    # MSLE expects inputs > -1; use uniform [0, 1)
    p = jax.random.uniform(kp, shape, dtype=jnp.float32)
    t = jax.random.uniform(kt, shape, dtype=jnp.float32)
    loss = msle_loss(p, t)
    jax.block_until_ready(loss)
    r = ref_loss(p, t)
    assert jnp.allclose(loss, r, rtol=1e-5, atol=1e-6), (loss, r)

    # 2) multi-tile / dual-core split / odd tile count / ragged last tile:
    #    1,049,600 elems -> 8200 rows -> 3 tiles of 4096 (clamped overhang step)
    shape2 = (2, 4, 320, 410)
    p2 = jax.random.uniform(kp, shape2, dtype=jnp.float32)
    t2 = jax.random.uniform(kt, shape2, dtype=jnp.float32)
    loss2 = msle_loss(p2, t2)
    jax.block_until_ready(loss2)
    r2 = ref_loss(p2, t2)
    assert jnp.allclose(loss2, r2, rtol=1e-5, atol=1e-6), (loss2, r2)

    # 3) n not a multiple of 128: exercises the pad-free wrapper-tail path
    shape3 = (3, 5, 17, 13)   # 3315 elements -> 3200 in-kernel + 115 tail
    p3 = jax.random.uniform(kp, shape3, dtype=jnp.float32)
    t3 = jax.random.uniform(kt, shape3, dtype=jnp.float32)
    loss3 = msle_loss(p3, t3)
    jax.block_until_ready(loss3)
    r3 = ref_loss(p3, t3)
    assert jnp.allclose(loss3, r3, rtol=1e-5, atol=1e-6), (loss3, r3)

    print("KERNEL_OK")
</pallas_src>

<mosaic_0001>
module attributes {stable_mosaic.version = 11 : i64} {
  func.func @_msle_kernel(%arg0: i32, %arg1: i32, %arg2: memref<16x128xf32, #tpu.memory_space<vmem>>, %arg3: memref<16x128xf32, #tpu.memory_space<vmem>>, %arg4: memref<1x8x128xf32, #tpu.memory_space<vmem>>) attributes {dimension_semantics = [#tpu.dimension_semantics<parallel>, #tpu.dimension_semantics<arbitrary>], iteration_bounds = array<i64: 1, 1>, scalar_prefetch = 0 : i64, scratch_operands = 0 : i64, tpu.core_type = #tpu.core_type<tc>, window_params = [{transform_indices = @transform_0, window_bounds = array<i64: 16, 128>}, {transform_indices = @transform_1, window_bounds = array<i64: 16, 128>}, {transform_indices = @transform_2, window_bounds = array<i64: 1, 8, 128>}]} {
    %c0_i32 = arith.constant 0 : i32
    %0 = arith.cmpi eq, %arg1, %c0_i32 : i32
    %1 = arith.extui %0 : i1 to i32
    %c0_i32_0 = arith.constant 0 : i32
    %2 = arith.cmpi ne, %1, %c0_i32_0 : i32
    scf.if %2 {
      %cst_10 = arith.constant 0.000000e+00 : f32
      %17 = vector.broadcast %cst_10 : f32 to vector<1x8x128xf32>
      %c0_11 = arith.constant 0 : index
      %c0_12 = arith.constant 0 : index
      %c0_13 = arith.constant 0 : index
      %18 = vector.load %arg4[%c0_11, %c0_12, %c0_13] : memref<1x8x128xf32, #tpu.memory_space<vmem>>, vector<1x8x128xf32>
      tpu.vector_store %arg4[%c0_11, %c0_12, %c0_13], %17 {strides = array<i32>} : memref<1x8x128xf32, #tpu.memory_space<vmem>>, vector<1x8x128xf32>,
    } else {
    }
    %c0 = arith.constant 0 : index
    %c0_1 = arith.constant 0 : index
    %3 = vector.load %arg2[%c0, %c0_1] : memref<16x128xf32, #tpu.memory_space<vmem>>, vector<16x128xf32>
    %c0_2 = arith.constant 0 : index
    %c0_3 = arith.constant 0 : index
    %4 = vector.load %arg3[%c0_2, %c0_3] : memref<16x128xf32, #tpu.memory_space<vmem>>, vector<16x128xf32>
    %5 = math.log1p %3 : vector<16x128xf32>
    %6 = math.log1p %4 : vector<16x128xf32>
    %7 = arith.subf %5, %6 : vector<16x128xf32>
    %8 = arith.mulf %7, %7 : vector<16x128xf32>
    %c0_4 = arith.constant 0 : index
    %c0_5 = arith.constant 0 : index
    %c0_6 = arith.constant 0 : index
    %9 = vector.load %arg4[%c0_4, %c0_5, %c0_6] : memref<1x8x128xf32, #tpu.memory_space<vmem>>, vector<1x8x128xf32>
    %10 = vector.shape_cast %9 : vector<1x8x128xf32> to vector<8x128xf32>
    %11 = vector.shape_cast %8 : vector<16x128xf32> to vector<2x8x128xf32>
    %cst = arith.constant dense<0.000000e+00> : vector<8x128xf32>
    %12 = vector.multi_reduction <add>, %11, %cst [0] : vector<2x8x128xf32> to vector<8x128xf32>
    %13 = arith.addf %10, %12 : vector<8x128xf32>
    %c0_7 = arith.constant 0 : index
    %c0_8 = arith.constant 0 : index
    %c0_9 = arith.constant 0 : index
    %14 = vector.load %arg4[%c0_7, %c0_8, %c0_9] : memref<1x8x128xf32, #tpu.memory_space<vmem>>, vector<1x8x128xf32>
    %15 = vector.shape_cast %14 : vector<1x8x128xf32> to vector<8x128xf32>
    %16 = vector.shape_cast %13 : vector<8x128xf32> to vector<1x8x128xf32>
    tpu.vector_store %arg4[%c0_7, %c0_8, %c0_9], %16 {strides = array<i32>} : memref<1x8x128xf32, #tpu.memory_space<vmem>>, vector<1x8x128xf32>,
    return
  }
  func.func @transform_0(%arg0: i32, %arg1: i32) -> (i32, i32) {
    %c1_i32 = arith.constant 1 : i32
    %0 = arith.muli %arg0, %c1_i32 : i32
    %1 = arith.addi %0, %arg1 : i32
    %c0_i32 = arith.constant 0 : i32
    %2 = arith.minsi %1, %c0_i32 : i32
    %c0_i32_0 = arith.constant 0 : i32
    %c0_i32_1 = arith.constant 0 : i32
    return %2, %c0_i32_0 : i32, i32
  }
  func.func @transform_1(%arg0: i32, %arg1: i32) -> (i32, i32) {
    %c1_i32 = arith.constant 1 : i32
    %0 = arith.muli %arg0, %c1_i32 : i32
    %1 = arith.addi %0, %arg1 : i32
    %c0_i32 = arith.constant 0 : i32
    %2 = arith.minsi %1, %c0_i32 : i32
    %c0_i32_0 = arith.constant 0 : i32
    %c0_i32_1 = arith.constant 0 : i32
    return %2, %c0_i32_0 : i32, i32
  }
  func.func @transform_2(%arg0: i32, %arg1: i32) -> (i32, i32, i32) {
    %c0_i32 = arith.constant 0 : i32
    %c0_i32_0 = arith.constant 0 : i32
    %c0_i32_1 = arith.constant 0 : i32
    return %arg0, %c0_i32, %c0_i32_0 : i32, i32, i32
  }
}

</mosaic_0001>

<llo_original>
// kernel: tpu_custom_call.1
$region0: #{tpu_custom_call.1}
  #allocation0 [shape = 'u32[]', space=smem, size = 0x4, offset = 0x4, fixed_abs, tag = 'smem constant byte address 0x4 - core index']
  #allocation1 [shape = 'u32[144,128]{1,0:T(1,128)}', space=vmem, size = 0x12000, scoped, tag = 'internal scratch']
  %s0 = inlined_call_operand.hbm [shape: f32[16,128], index: 0, kind: input, shape index: {}]
  %s1 = inlined_call_operand.hbm [shape: f32[16,128], index: 1, kind: input, shape index: {}]
  %s2 = inlined_call_operand.hbm [shape: f32[1,8,128], index: 2, kind: output, shape index: {}]
  %s3 = sld [smem:[#allocation0]]
  $region30: #{tpu_custom_call.1} parent=0
    _
  %s5 = ssub.s32 1, %s3
  %s6 = scalar_select 0, %s5, %s3
  $region1: #{tpu_custom_call.1} parent=0
    #allocation2 [shape = 'u8[8192]{0}', space=vmem, size = 0x2000, scoped, tag = 'input window, operand 0, single buffered']
    #allocation3 [shape = 's32[1]{0}', space=sflag, size = 0x4, scoped, tag = 'scoped memory for tpu_custom_call.1']
    #allocation4 [shape = 's32[1]{0}', space=sflag, size = 0x4, scoped, tag = 'scoped memory for tpu_custom_call.1']
    #allocation5 [shape = 'u8[8192]{0}', space=vmem, size = 0x2000, scoped, tag = 'input window, operand 1, single buffered']
    #allocation6 [shape = 's32[1]{0}', space=sflag, size = 0x4, scoped, tag = 'scoped memory for tpu_custom_call.1']
    #allocation7 [shape = 'u8[4096]{0}', space=vmem, size = 0x1000, scoped, tag = 'output window, operand 0, single buffered']
    %7 = vsyncpa [#allocation3], 0
    %8 = vsyncpa [#allocation6], 0
    %9 = vsyncpa [#allocation4], 0
    // Predicated region
    $region2: #{tpu_custom_call.1} parent=1 // pred_check
      _
    $region3: #{tpu_custom_call.1} parent=1 // pred_check_branch
      %11 = sbr.rel (0) target = $region5
    $region4: #{tpu_custom_call.1} parent=1 // pred_region
      %s12 = sadd.s32 0, 0
      %p13 = scmp.lt.s32.totalorder %s12, 0
      %s14 = scalar_select %p13, %s12, 0
      %s15 = smul.u32 2, %s14
      %s17 = ssub.s32 256, 256
      %18 = vsyncadd [#allocation3], %s17
      %s19 = smul.addr %s15, 128
      %s20 = scalar_lea.hbm %s0, %s19
      %s21 = sshll.u32 [#allocation2], 4
      %s22 = int_to_ptr.vmem [resolvable:$true] %s21
      %27 = dma.hbm_to_vmem [thread:$0]  %s20, 256, %s22, [#allocation3], 128, 128, 8
    $region5: #{tpu_custom_call.1} parent=1 // pred_fallthru
      _
    // Predicated region
    $region6: #{tpu_custom_call.1} parent=1 // pred_check
      _
    $region7: #{tpu_custom_call.1} parent=1 // pred_check_branch
      %29 = sbr.rel (0) target = $region9
    $region8: #{tpu_custom_call.1} parent=1 // pred_region
      %s30 = sadd.s32 0, 0
      %p31 = scmp.lt.s32.totalorder %s30, 0
      %s32 = scalar_select %p31, %s30, 0
      %s33 = smul.u32 2, %s32
      %s35 = ssub.s32 256, 256
      %36 = vsyncadd [#allocation6], %s35
      %s37 = smul.addr %s33, 128
      %s38 = scalar_lea.hbm %s1, %s37
      %s39 = sshll.u32 [#allocation5], 4
      %s40 = int_to_ptr.vmem [resolvable:$true] %s39
      %45 = dma.hbm_to_vmem [thread:$0]  %s38, 256, %s40, [#allocation6], 128, 128, 8
    $region9: #{tpu_custom_call.1} parent=1 // pred_fallthru
      _
    // Predicated region
    $region10: #{tpu_custom_call.1} parent=1 // pred_check
      _
    $region11: #{tpu_custom_call.1} parent=1 // pred_check_branch
      %47 = sbr.rel (0) target = $region13
    $region12: #{tpu_custom_call.1} parent=1 // pred_region
      %48 = dma.done [#allocation3], 256
    $region13: #{tpu_custom_call.1} parent=1 // pred_fallthru
      _
    // Predicated region
    $region14: #{tpu_custom_call.1} parent=1 // pred_check
      _
    $region15: #{tpu_custom_call.1} parent=1 // pred_check_branch
      %50 = sbr.rel (0) target = $region17
    $region16: #{tpu_custom_call.1} parent=1 // pred_region
      %51 = dma.done [#allocation6], 256
    $region17: #{tpu_custom_call.1} parent=1 // pred_fallthru
      _
    %s52 = sadd.s32 0, 0
    %p53 = scmp.lt.s32.totalorder %s52, 0
    %s54 = scalar_select %p53, %s52, 0
    %s55 = smul.u32 2, %s54
    %s56 = sadd.s32 0, 0
    %p57 = scmp.lt.s32.totalorder %s56, 0
    %s58 = scalar_select %p57, %s56, 0
    %s59 = smul.u32 2, %s58
    %p60 = scmp.eq.s32.totalorder 0, 0
    // Predicated region
    $region18: #{tpu_custom_call.1} parent=1 // pred_check
      %p61 = pneg %p60
    $region19: #{tpu_custom_call.1} parent=1 // pred_check_branch
      %63 = sbr.rel (%p61) target = $region21
    $region20: #{tpu_custom_call.1} parent=1 // pred_region
      %64 = vst [vmem:[#allocation7] sm:$0xff] 0.0
    $region21: #{tpu_custom_call.1} parent=1 // pred_fallthru
      _
    %v65 = vld [vmem:[#allocation2] sm:$0xff]
    %v66 = vld [vmem:[#allocation2 + $0x8] sm:$0xff]
    %v67 = vld [vmem:[#allocation5] sm:$0xff]
    %v68 = vld [vmem:[#allocation5 + $0x8] sm:$0xff]
    %v69 = vadd.f32 %v65, 1.0
    %v70 = vlog2.pop %v69
    %v71 = vmul.f32 %v70, 0.6931472
    %v72 = vmul.f32 -0.5, %v65
    %v73 = vadd.f32 %v72, 1.0
    %v74 = vmul.f32 %v73, %v65
    %v75 = vand.u32 2147483647, %v65
    %vm76 = vcmp.lt.f32.partialorder %v75, 0.0004427343
    %v77 = vsel %vm76, %v74, %v71
    %v78 = vadd.f32 %v66, 1.0
    %v79 = vlog2.pop %v78
    %v80 = vmul.f32 %v79, 0.6931472
    %v81 = vmul.f32 -0.5, %v66
    %v82 = vadd.f32 %v81, 1.0
    %v83 = vmul.f32 %v82, %v66
    %v84 = vand.u32 2147483647, %v66
    %vm85 = vcmp.lt.f32.partialorder %v84, 0.0004427343
    %v86 = vsel %vm85, %v83, %v80
    %v87 = vadd.f32 %v67, 1.0
    %v88 = vlog2.pop %v87
    %v89 = vmul.f32 %v88, 0.6931472
    %v90 = vmul.f32 -0.5, %v67
    %v91 = vadd.f32 %v90, 1.0
    %v92 = vmul.f32 %v91, %v67
    %v93 = vand.u32 2147483647, %v67
    %vm94 = vcmp.lt.f32.partialorder %v93, 0.0004427343
    %v95 = vsel %vm94, %v92, %v89
    %v96 = vadd.f32 %v68, 1.0
    %v97 = vlog2.pop %v96
    %v98 = vmul.f32 %v97, 0.6931472
    %v99 = vmul.f32 -0.5, %v68
    %v100 = vadd.f32 %v99, 1.0
    %v101 = vmul.f32 %v100, %v68
    %v102 = vand.u32 2147483647, %v68
    %vm103 = vcmp.lt.f32.partialorder %v102, 0.0004427343
    %v104 = vsel %vm103, %v101, %v98
    %v105 = vsub.f32 %v77, %v95
    %v106 = vsub.f32 %v86, %v104
    %v107 = vmul.f32 %v105, %v105
    %v108 = vmul.f32 %v106, %v106
    %v109 = vld [vmem:[#allocation7] sm:$0xff]
    %v110 = vadd.f32 %v107, %v108
    %v111 = vadd.f32 %v109, %v110
    %112 = vst [vmem:[#allocation7] sm:$0xff] %v111
    // Predicated region
    $region22: #{tpu_custom_call.1} parent=1 // pred_check
      _
    $region23: #{tpu_custom_call.1} parent=1 // pred_check_branch
      %114 = sbr.rel (0) target = $region25
    $region24: #{tpu_custom_call.1} parent=1 // pred_region
      %s116 = ssub.s32 128, 128
      %117 = vsyncadd [#allocation4], %s116
      %s119 = sshll.u32 [#allocation7], 4
      %s120 = int_to_ptr.vmem [resolvable:$true] %s119
      %122 = dma.vmem_to_hbm [thread:$0]  %s120, 128, %s2, [#allocation4]
    $region25: #{tpu_custom_call.1} parent=1 // pred_fallthru
      _
    // Predicated region
    $region26: #{tpu_custom_call.1} parent=1 // pred_check
      _
    $region27: #{tpu_custom_call.1} parent=1 // pred_check_branch
      %124 = sbr.rel (0) target = $region29
    $region28: #{tpu_custom_call.1} parent=1 // pred_region
      %125 = dma.done [#allocation4], 128
    $region29: #{tpu_custom_call.1} parent=1 // pred_fallthru
      _
    %126 = vsyncpa [#allocation3], 1
    %127 = vsyncpa [#allocation6], 1
    %128 = vsyncpa [#allocation4], 1

</llo_original>
